<compile_context>
chip_gen: v6e
topology: v6e:2x2x1
jax: 0.10.0
libtpu: 0.0.40
codegen_flags: <defaults>
</compile_context>

<pallas_src>
import jax
import jax.numpy as jnp
from jax.experimental import pallas as pl
from jax.experimental.pallas import tpu as pltpu

LANE = 128
MAX_TILE_ROWS = 4096    # 4096 x 128 x 4B = 2 MiB per f32 input block
MIN_SPLIT_ROWS = 2048   # above ~1 MiB of rows, force >= 2 grid steps (megacore / v7x)


def _add_kernel(a_ref, b_ref, o_ref):
    o_ref[...] = a_ref[...] + b_ref[...]


def _round_up(x: int, m: int) -> int:
    return ((x + m - 1) // m) * m


def _elementwise_add_impl(a: jax.Array, b: jax.Array) -> jax.Array:
    assert a.shape == b.shape, "elementwise_add_cuda semantics: same shape"
    assert a.dtype == b.dtype
    orig_shape = a.shape
    n = a.size
    if n == 0:
        return a + b  # degenerate empty tensor

    itemsize = jnp.dtype(a.dtype).itemsize
    sub = max(8, 32 // itemsize)          # min sublane multiple for this dtype (8 for f32)

    rows = pl.cdiv(n, LANE)
    padded_n = rows * LANE

    if padded_n == n:
        # Common case: pure reshape, no pad copy and no output slice copy.
        a2 = a.reshape(rows, LANE)
        b2 = b.reshape(rows, LANE)
    else:
        # Tail shorter than one 128-lane row: pad up to a full row.
        pad = padded_n - n
        a2 = jnp.pad(a.reshape(-1), (0, pad)).reshape(rows, LANE)
        b2 = jnp.pad(b.reshape(-1), (0, pad)).reshape(rows, LANE)

    if rows <= MIN_SPLIT_ROWS:
        # Single block spanning the whole row axis (block dim == array dim, so
        # no (8,128)-divisibility requirement even for odd row counts).
        tile_rows = rows
    else:
        # Large sublane-aligned tile (<= 2 MiB/input) with at least 2 grid
        # steps so both v7x TensorCores get work; partial last block is fine.
        tile_rows = min(MAX_TILE_ROWS, _round_up(pl.cdiv(rows, 2), sub))
    grid = (pl.cdiv(rows, tile_rows),)

    # VMEM budget: 3 arrays x 2 pipeline buffers x tile bytes, plus headroom.
    # Capped at 32 MiB so it is safe on v5e/v6e (128 MiB) and v7x (64 MiB).
    tile_bytes = tile_rows * LANE * itemsize
    vmem_limit = int(min(max(6 * tile_bytes + (4 << 20), 16 << 20), 32 << 20))

    out = pl.pallas_call(
        _add_kernel,
        out_shape=jax.ShapeDtypeStruct((rows, LANE), a.dtype),
        grid_spec=pltpu.PrefetchScalarGridSpec(
            num_scalar_prefetch=0,
            grid=grid,
            in_specs=[
                pl.BlockSpec((tile_rows, LANE), lambda i: (i, 0)),
                pl.BlockSpec((tile_rows, LANE), lambda i: (i, 0)),
            ],
            out_specs=pl.BlockSpec((tile_rows, LANE), lambda i: (i, 0)),
        ),
        compiler_params=pltpu.CompilerParams(
            dimension_semantics=("parallel",),
            vmem_limit_bytes=vmem_limit,
        ),
    )(a2, b2)

    if padded_n == n:
        return out.reshape(orig_shape)
    return out.reshape(-1)[:n].reshape(orig_shape)


# Jit the wrapper so the reshape/pad/slice plumbing fuses with the kernel call.
elementwise_add = jax.jit(_elementwise_add_impl)


if __name__ == "__main__":
    key = jax.random.PRNGKey(0)
    k1, k2, k3, k4 = jax.random.split(key, 4)

    # Primary case consistent with a generic elementwise-add module.
    shape = (2, 4, 16, 16)
    a = jax.random.normal(k1, shape, dtype=jnp.float32)
    b = jax.random.normal(k2, shape, dtype=jnp.float32)
    out = elementwise_add(a, b)
    jax.block_until_ready(out)
    ref = a + b
    assert out.shape == ref.shape and out.dtype == ref.dtype
    assert jnp.allclose(out, ref, atol=1e-6, rtol=1e-6)

    # Secondary case exercising the non-multiple-of-128 (padded tail) path.
    shape2 = (3, 5, 7)
    a2 = jax.random.normal(k3, shape2, dtype=jnp.float32)
    b2 = jax.random.normal(k4, shape2, dtype=jnp.float32)
    out2 = elementwise_add(a2, b2)
    jax.block_until_ready(out2)
    ref2 = a2 + b2
    assert out2.shape == ref2.shape and out2.dtype == ref2.dtype
    assert jnp.allclose(out2, ref2, atol=1e-6, rtol=1e-6)

    print("KERNEL_OK")
</pallas_src>

<mosaic_0001>
module attributes {stable_mosaic.version = 11 : i64} {
  func.func @_add_kernel(%arg0: i32, %arg1: memref<16x128xf32, #tpu.memory_space<vmem>>, %arg2: memref<16x128xf32, #tpu.memory_space<vmem>>, %arg3: memref<16x128xf32, #tpu.memory_space<vmem>>) attributes {dimension_semantics = [#tpu.dimension_semantics<parallel>], iteration_bounds = array<i64: 1>, scalar_prefetch = 0 : i64, scratch_operands = 0 : i64, tpu.core_type = #tpu.core_type<tc>, window_params = [{transform_indices = @transform_0, window_bounds = array<i64: 16, 128>}, {transform_indices = @transform_1, window_bounds = array<i64: 16, 128>}, {transform_indices = @transform_2, window_bounds = array<i64: 16, 128>}]} {
    %c0 = arith.constant 0 : index
    %c0_0 = arith.constant 0 : index
    %0 = vector.load %arg1[%c0, %c0_0] : memref<16x128xf32, #tpu.memory_space<vmem>>, vector<16x128xf32>
    %c0_1 = arith.constant 0 : index
    %c0_2 = arith.constant 0 : index
    %1 = vector.load %arg2[%c0_1, %c0_2] : memref<16x128xf32, #tpu.memory_space<vmem>>, vector<16x128xf32>
    %2 = arith.addf %0, %1 : vector<16x128xf32>
    %c0_3 = arith.constant 0 : index
    %c0_4 = arith.constant 0 : index
    %3 = vector.load %arg3[%c0_3, %c0_4] : memref<16x128xf32, #tpu.memory_space<vmem>>, vector<16x128xf32>
    tpu.vector_store %arg3[%c0_3, %c0_4], %2 {strides = array<i32>} : memref<16x128xf32, #tpu.memory_space<vmem>>, vector<16x128xf32>,
    return
  }
  func.func @transform_0(%arg0: i32) -> (i32, i32) {
    %c0_i32 = arith.constant 0 : i32
    %c0_i32_0 = arith.constant 0 : i32
    return %arg0, %c0_i32 : i32, i32
  }
  func.func @transform_1(%arg0: i32) -> (i32, i32) {
    %c0_i32 = arith.constant 0 : i32
    %c0_i32_0 = arith.constant 0 : i32
    return %arg0, %c0_i32 : i32, i32
  }
  func.func @transform_2(%arg0: i32) -> (i32, i32) {
    %c0_i32 = arith.constant 0 : i32
    %c0_i32_0 = arith.constant 0 : i32
    return %arg0, %c0_i32 : i32, i32
  }
}

</mosaic_0001>

<llo_original>
// kernel: _elementwise_add_impl.1
$region0: #{_elementwise_add_impl.1}
  #allocation0 [shape = 'u32[]', space=smem, size = 0x4, offset = 0x4, fixed_abs, tag = 'smem constant byte address 0x4 - core index']
  #allocation1 [shape = 'u32[144,128]{1,0:T(1,128)}', space=vmem, size = 0x12000, scoped, tag = 'internal scratch']
  %s0 = inlined_call_operand.vmem [shape: f32[16,128], index: 0, kind: input, shape index: {}]
  %s1 = inlined_call_operand.vmem [shape: f32[16,128], index: 1, kind: input, shape index: {}]
  %s2 = inlined_call_operand.vmem [shape: f32[16,128], index: 2, kind: output, shape index: {}]
  %s3 = sld [smem:[#allocation0]]
  $region18: #{_elementwise_add_impl.1} parent=0
    _
  %s5 = ssub.s32 1, %s3
  %s6 = scalar_select 0, %s5, %s3
  // Predicated region
  $region2: #{_elementwise_add_impl.1} parent=0 // pred_check
    _
  $region3: #{_elementwise_add_impl.1} parent=0 // pred_check_branch
    %8 = sbr.rel (0) target = $region5
  $region4: #{_elementwise_add_impl.1} parent=0 // pred_region
    _
  $region5: #{_elementwise_add_impl.1} parent=0 // pred_fallthru
    _
  // Predicated region
  $region6: #{_elementwise_add_impl.1} parent=0 // pred_check
    _
  $region7: #{_elementwise_add_impl.1} parent=0 // pred_check_branch
    %10 = sbr.rel (0) target = $region9
  $region8: #{_elementwise_add_impl.1} parent=0 // pred_region
    _
  $region9: #{_elementwise_add_impl.1} parent=0 // pred_fallthru
    _
  %v11 = vld [vmem:[%s0] sm:$0xff]
  %v12 = vld [vmem:[%s0 + $0x8] sm:$0xff]
  %v13 = vld [vmem:[%s1] sm:$0xff]
  %v14 = vld [vmem:[%s1 + $0x8] sm:$0xff]
  %v15 = vadd.f32 %v11, %v13
  %v16 = vadd.f32 %v12, %v14
  %17 = vst [vmem:[%s2] sm:$0xff] %v15
  %18 = vst [vmem:[%s2 + $0x8] sm:$0xff] %v16
  // Predicated region
  $region10: #{_elementwise_add_impl.1} parent=0 // pred_check
    _
  $region11: #{_elementwise_add_impl.1} parent=0 // pred_check_branch
    %20 = sbr.rel (0) target = $region13
  $region12: #{_elementwise_add_impl.1} parent=0 // pred_region
    _
  $region13: #{_elementwise_add_impl.1} parent=0 // pred_fallthru
    _
  // Predicated region
  $region14: #{_elementwise_add_impl.1} parent=0 // pred_check
    _
  $region15: #{_elementwise_add_impl.1} parent=0 // pred_check_branch
    %22 = sbr.rel (0) target = $region17
  $region16: #{_elementwise_add_impl.1} parent=0 // pred_region
    _
  $region17: #{_elementwise_add_impl.1} parent=0 // pred_fallthru
    _

</llo_original>
